<compile_context>
chip_gen: v5e
topology: v5e:2x2
jax: 0.10.0
libtpu: 0.0.40
codegen_flags: <defaults>
</compile_context>

<pallas_src>
import jax
import jax.numpy as jnp
from jax.experimental import pallas as pl
from jax.experimental.pallas import tpu as pltpu

EPS = 1e-5
LANE = 128      # lane-dense padding of hidden widths (256-wide tiles pay off on v6e/v7x for big layers)
MAX_TB = 512    # max batch-tile rows per grid step


def _round_up(n, m):
    return ((n + m - 1) // m) * m


def _make_fused_mlp_kernel(num_layers, true_out_dims, d_last):
    """Fused kernel: num_layers x (Linear + ReLU + LayerNorm), all in VMEM/vregs."""

    def kernel(x_ref, *refs):
        # refs = (w_0, p_0, w_1, p_1, ..., w_{L-1}, p_{L-1}, o_ref)
        o_ref = refs[-1]
        h = x_ref[...].astype(jnp.float32)                    # [TB, d_in] true width
        for li in range(num_layers):
            w_ref = refs[2 * li]                              # [K_li, Dpad_out] (bf16 or f32)
            p_ref = refs[2 * li + 1]                          # [3, Dpad_out] f32: bias/gamma/beta
            inv_d = 1.0 / float(true_out_dims[li])

            # MXU matmul, f32 accumulation; operands in the weight storage dtype.
            y = jnp.dot(h.astype(w_ref.dtype), w_ref[...],
                        preferred_element_type=jnp.float32)
            y = y + p_ref[0:1, :]                             # bias (zero-padded lanes)
            y = jnp.maximum(y, 0.0)                           # relu

            # One-pass LayerNorm statistics.  Padded lanes of y are exactly 0
            # (zero weight columns + zero bias), so no masking is needed; the
            # sums are simply divided by the TRUE feature width.
            s1 = jnp.sum(y, axis=-1, keepdims=True) * inv_d           # mean
            s2 = jnp.sum(y * y, axis=-1, keepdims=True) * inv_d       # E[y^2]
            var = jnp.maximum(s2 - s1 * s1, 0.0)                      # clamp cancellation
            y = (y - s1) * jax.lax.rsqrt(var + EPS)
            # Affine; gamma/beta zero-padded -> padded lanes return to exact 0,
            # safe to feed into the next layer's (zero-padded) weight slab.
            h = y * p_ref[1:2, :] + p_ref[2:3, :]

        o_ref[...] = h[:, :d_last].astype(o_ref.dtype)        # true output width only

    return kernel


def init_mlp_params(key, input_dim, hidden_sizes, gain, weight_dtype=jnp.bfloat16):
    """One-time parameter prep: transpose, lane-pad and pack everything.

    Per layer i:
      w_pad : [K_i, Dpad_out]  PyTorch (out,in) weight, transposed, zero-padded.
              K_0 is the TRUE input_dim (no wrapper-side x padding needed);
              K_{i>0} is the previous layer's padded width.
      p_pad : [3, Dpad_out]    rows = (bias, gamma, beta); padding = 0.
    """
    dims = [input_dim] + list(hidden_sizes)
    flat, raw = [], []
    for i, d_out in enumerate(hidden_sizes):
        d_in = dims[i]
        k_dim = d_in if i == 0 else _round_up(d_in, LANE)
        dp_out = _round_up(d_out, LANE)

        key, wk = jax.random.split(key)
        # scaled-normal stand-in for orthogonal init with the given gain
        w = gain * jax.random.normal(wk, (d_out, d_in), jnp.float32) / jnp.sqrt(d_in)
        b = jnp.zeros((d_out,), jnp.float32)          # nn.init.constant_(0)
        gamma = jnp.ones((d_out,), jnp.float32)       # LayerNorm defaults
        beta = jnp.zeros((d_out,), jnp.float32)
        raw.append((w, b, gamma, beta))

        w_pad = jnp.zeros((k_dim, dp_out), jnp.float32).at[:d_in, :d_out].set(w.T)
        p_pad = jnp.zeros((3, dp_out), jnp.float32)
        p_pad = p_pad.at[0, :d_out].set(b)
        p_pad = p_pad.at[1, :d_out].set(gamma)
        p_pad = p_pad.at[2, :d_out].set(beta)
        flat += [w_pad.astype(weight_dtype), p_pad]

    prepped = {
        "flat": tuple(flat),
        "true_out_dims": tuple(hidden_sizes),
        "input_dim": input_dim,
    }
    return prepped, raw


def mlp_layer_forward(x, prepped, max_batch_tile=MAX_TB):
    """Full MLPLayer.forward as a single batch-tiled pallas_call."""
    B, d_in = x.shape
    assert d_in == prepped["input_dim"]
    out_dims = prepped["true_out_dims"]
    num_layers = len(out_dims)
    d_last = out_dims[-1]
    flat = prepped["flat"]

    tb = B if B <= max_batch_tile else max_batch_tile
    grid = (pl.cdiv(B, tb),)

    # x / out are batch-tiled; weights & param slabs use a constant block index
    # so they stay resident across all grid steps.
    x_spec = pl.BlockSpec((tb, d_in), lambda i: (i, 0))
    out_spec = pl.BlockSpec((tb, d_last), lambda i: (i, 0))
    param_specs = [pl.BlockSpec(a.shape, lambda i: (0, 0)) for a in flat]

    # VMEM budget: resident params + generous activation headroom (double-buffered tiles).
    param_bytes = sum(a.size * a.dtype.itemsize for a in flat)
    max_width = max([d_in] + [_round_up(d, LANE) for d in out_dims])
    act_bytes = tb * max_width * 4
    vmem_limit = int(min(128 * 1024 * 1024,
                         max(32 * 1024 * 1024, 2 * param_bytes + 16 * act_bytes)))

    dims = [d_in] + list(out_dims)
    flops = 2 * B * sum(dims[i] * dims[i + 1] for i in range(num_layers))
    bytes_accessed = (x.size * x.dtype.itemsize
                      + B * d_last * 4
                      + param_bytes)

    kernel = _make_fused_mlp_kernel(num_layers, out_dims, d_last)
    out = pl.pallas_call(
        kernel,
        out_shape=jax.ShapeDtypeStruct((B, d_last), jnp.float32),
        grid=grid,
        in_specs=[x_spec] + param_specs,
        out_specs=out_spec,
        compiler_params=pltpu.CompilerParams(
            dimension_semantics=("parallel",),
            vmem_limit_bytes=vmem_limit,
        ),
        cost_estimate=pl.CostEstimate(
            flops=flops,
            transcendentals=B * num_layers,
            bytes_accessed=bytes_accessed,
        ),
    )(x, *flat)
    return out


def mlp_reference(x, raw_params, dot_dtype=jnp.float32):
    """Pure-JAX reference with PyTorch semantics (matmul operands in dot_dtype)."""
    h = x.astype(jnp.float32)
    for (w, b, gamma, beta) in raw_params:
        y = jnp.dot(h.astype(dot_dtype), w.T.astype(dot_dtype),
                    preferred_element_type=jnp.float32) + b
        y = jnp.maximum(y, 0.0)
        mean = jnp.mean(y, axis=-1, keepdims=True)
        var = jnp.mean((y - mean) ** 2, axis=-1, keepdims=True)
        y = (y - mean) * jax.lax.rsqrt(var + EPS)
        h = y * gamma + beta
    return h


if __name__ == "__main__":
    key = jax.random.PRNGKey(0)

    batch = 8
    input_dim = 16
    hidden_sizes = [32, 32]
    gain = float(jnp.sqrt(2.0))   # nn.init.calculate_gain('relu')

    key, xk, pk = jax.random.split(key, 3)
    x = jax.random.normal(xk, (batch, input_dim), jnp.float32)

    # --- f32 weights: tight match to the PyTorch module numerics ---------------
    prepped32, raw = init_mlp_params(pk, input_dim, hidden_sizes, gain,
                                     weight_dtype=jnp.float32)
    out32 = jax.block_until_ready(mlp_layer_forward(x, prepped32))
    ref32 = mlp_reference(x, raw, dot_dtype=jnp.float32)
    assert out32.shape == (batch, hidden_sizes[-1])
    assert bool(jnp.all(jnp.isfinite(out32)))
    err32 = float(jnp.max(jnp.abs(out32 - ref32)))
    assert err32 < 2e-4, err32

    # --- bf16 weight storage (v6e/v7x perf path), f32 accumulate/LN ------------
    prepped16, _ = init_mlp_params(pk, input_dim, hidden_sizes, gain,
                                   weight_dtype=jnp.bfloat16)
    out16 = jax.block_until_ready(mlp_layer_forward(x, prepped16))
    ref16 = mlp_reference(x, raw, dot_dtype=jnp.bfloat16)
    assert bool(jnp.all(jnp.isfinite(out16)))
    err16 = float(jnp.max(jnp.abs(out16 - ref16)))
    assert err16 < 5e-3, err16

    print("KERNEL_OK")
</pallas_src>

<mosaic_0001>
module attributes {stable_mosaic.version = 11 : i64} {
  func.func @kernel(%arg0: i32, %arg1: memref<8x16xf32, #tpu.memory_space<vmem>>, %arg2: memref<16x128xf32, #tpu.memory_space<vmem>>, %arg3: memref<3x128xf32, #tpu.memory_space<vmem>>, %arg4: memref<128x128xf32, #tpu.memory_space<vmem>>, %arg5: memref<3x128xf32, #tpu.memory_space<vmem>>, %arg6: memref<8x32xf32, #tpu.memory_space<vmem>>) attributes {dimension_semantics = [#tpu.dimension_semantics<parallel>], iteration_bounds = array<i64: 1>, scalar_prefetch = 0 : i64, scratch_operands = 0 : i64, tpu.core_type = #tpu.core_type<tc>, window_params = [{transform_indices = @transform_0, window_bounds = array<i64: 8, 16>}, {pipeline_mode = #tpu.pipeline_mode<synchronous>, transform_indices = @transform_1, window_bounds = array<i64: 16, 128>}, {pipeline_mode = #tpu.pipeline_mode<synchronous>, transform_indices = @transform_2, window_bounds = array<i64: 3, 128>}, {pipeline_mode = #tpu.pipeline_mode<synchronous>, transform_indices = @transform_3, window_bounds = array<i64: 128, 128>}, {pipeline_mode = #tpu.pipeline_mode<synchronous>, transform_indices = @transform_4, window_bounds = array<i64: 3, 128>}, {transform_indices = @transform_5, window_bounds = array<i64: 8, 32>}]} {
    %c0 = arith.constant 0 : index
    %c0_0 = arith.constant 0 : index
    %0 = vector.load %arg1[%c0, %c0_0] : memref<8x16xf32, #tpu.memory_space<vmem>>, vector<8x16xf32>
    %c0_1 = arith.constant 0 : index
    %c0_2 = arith.constant 0 : index
    %1 = vector.load %arg2[%c0_1, %c0_2] : memref<16x128xf32, #tpu.memory_space<vmem>>, vector<16x128xf32>
    %cst = arith.constant dense<0.000000e+00> : vector<8x128xf32>
    %2 = tpu.matmul %0, %1, %cst {dimension_numbers = #tpu.dot_dimension_numbers<[1], [0], [0], [1], [0, 0, 1, 1], [], []>} : vector<8x16xf32>, vector<16x128xf32>, vector<8x128xf32> -> vector<8x128xf32>
    %c0_3 = arith.constant 0 : index
    %c0_4 = arith.constant 0 : index
    %3 = vector.load %arg3[%c0_3, %c0_4] : memref<3x128xf32, #tpu.memory_space<vmem>>, vector<1x128xf32>
    %4 = vector.broadcast %3 : vector<1x128xf32> to vector<8x128xf32>
    %5 = arith.addf %2, %4 : vector<8x128xf32>
    %cst_5 = arith.constant 0.000000e+00 : f32
    %6 = vector.broadcast %cst_5 : f32 to vector<8x128xf32>
    %7 = arith.maximumf %5, %6 : vector<8x128xf32>
    %cst_6 = arith.constant dense<0.000000e+00> : vector<8xf32>
    %8 = vector.multi_reduction <add>, %7, %cst_6 [1] : vector<8x128xf32> to vector<8xf32>
    %9 = vector.shape_cast %8 : vector<8xf32> to vector<8x1xf32>
    %cst_7 = arith.constant 3.125000e-02 : f32
    %10 = vector.broadcast %cst_7 : f32 to vector<8x1xf32>
    %11 = arith.mulf %9, %10 : vector<8x1xf32>
    %12 = arith.mulf %7, %7 : vector<8x128xf32>
    %cst_8 = arith.constant dense<0.000000e+00> : vector<8xf32>
    %13 = vector.multi_reduction <add>, %12, %cst_8 [1] : vector<8x128xf32> to vector<8xf32>
    %14 = vector.shape_cast %13 : vector<8xf32> to vector<8x1xf32>
    %cst_9 = arith.constant 3.125000e-02 : f32
    %15 = vector.broadcast %cst_9 : f32 to vector<8x1xf32>
    %16 = arith.mulf %14, %15 : vector<8x1xf32>
    %17 = arith.mulf %11, %11 : vector<8x1xf32>
    %18 = arith.subf %16, %17 : vector<8x1xf32>
    %cst_10 = arith.constant 0.000000e+00 : f32
    %19 = vector.broadcast %cst_10 : f32 to vector<8x1xf32>
    %20 = arith.maximumf %18, %19 : vector<8x1xf32>
    %21 = vector.broadcast %11 : vector<8x1xf32> to vector<8x128xf32>
    %22 = arith.subf %7, %21 : vector<8x128xf32>
    %cst_11 = arith.constant 9.99999974E-6 : f32
    %23 = vector.broadcast %cst_11 : f32 to vector<8x1xf32>
    %24 = arith.addf %20, %23 : vector<8x1xf32>
    %25 = math.rsqrt %24 : vector<8x1xf32>
    %26 = vector.broadcast %25 : vector<8x1xf32> to vector<8x128xf32>
    %27 = arith.mulf %22, %26 : vector<8x128xf32>
    %c1 = arith.constant 1 : index
    %c0_12 = arith.constant 0 : index
    %28 = vector.load %arg3[%c1, %c0_12] : memref<3x128xf32, #tpu.memory_space<vmem>>, vector<1x128xf32>
    %29 = vector.broadcast %28 : vector<1x128xf32> to vector<8x128xf32>
    %30 = arith.mulf %27, %29 : vector<8x128xf32>
    %c2 = arith.constant 2 : index
    %c0_13 = arith.constant 0 : index
    %31 = vector.load %arg3[%c2, %c0_13] : memref<3x128xf32, #tpu.memory_space<vmem>>, vector<1x128xf32>
    %32 = vector.broadcast %31 : vector<1x128xf32> to vector<8x128xf32>
    %33 = arith.addf %30, %32 : vector<8x128xf32>
    %c0_14 = arith.constant 0 : index
    %c0_15 = arith.constant 0 : index
    %34 = vector.load %arg4[%c0_14, %c0_15] : memref<128x128xf32, #tpu.memory_space<vmem>>, vector<128x128xf32>
    %cst_16 = arith.constant dense<0.000000e+00> : vector<8x128xf32>
    %35 = tpu.matmul %33, %34, %cst_16 {dimension_numbers = #tpu.dot_dimension_numbers<[1], [0], [0], [1], [0, 0, 1, 1], [], []>} : vector<8x128xf32>, vector<128x128xf32>, vector<8x128xf32> -> vector<8x128xf32>
    %c0_17 = arith.constant 0 : index
    %c0_18 = arith.constant 0 : index
    %36 = vector.load %arg5[%c0_17, %c0_18] : memref<3x128xf32, #tpu.memory_space<vmem>>, vector<1x128xf32>
    %37 = vector.broadcast %36 : vector<1x128xf32> to vector<8x128xf32>
    %38 = arith.addf %35, %37 : vector<8x128xf32>
    %cst_19 = arith.constant 0.000000e+00 : f32
    %39 = vector.broadcast %cst_19 : f32 to vector<8x128xf32>
    %40 = arith.maximumf %38, %39 : vector<8x128xf32>
    %cst_20 = arith.constant dense<0.000000e+00> : vector<8xf32>
    %41 = vector.multi_reduction <add>, %40, %cst_20 [1] : vector<8x128xf32> to vector<8xf32>
    %42 = vector.shape_cast %41 : vector<8xf32> to vector<8x1xf32>
    %cst_21 = arith.constant 3.125000e-02 : f32
    %43 = vector.broadcast %cst_21 : f32 to vector<8x1xf32>
    %44 = arith.mulf %42, %43 : vector<8x1xf32>
    %45 = arith.mulf %40, %40 : vector<8x128xf32>
    %cst_22 = arith.constant dense<0.000000e+00> : vector<8xf32>
    %46 = vector.multi_reduction <add>, %45, %cst_22 [1] : vector<8x128xf32> to vector<8xf32>
    %47 = vector.shape_cast %46 : vector<8xf32> to vector<8x1xf32>
    %cst_23 = arith.constant 3.125000e-02 : f32
    %48 = vector.broadcast %cst_23 : f32 to vector<8x1xf32>
    %49 = arith.mulf %47, %48 : vector<8x1xf32>
    %50 = arith.mulf %44, %44 : vector<8x1xf32>
    %51 = arith.subf %49, %50 : vector<8x1xf32>
    %cst_24 = arith.constant 0.000000e+00 : f32
    %52 = vector.broadcast %cst_24 : f32 to vector<8x1xf32>
    %53 = arith.maximumf %51, %52 : vector<8x1xf32>
    %54 = vector.broadcast %44 : vector<8x1xf32> to vector<8x128xf32>
    %55 = arith.subf %40, %54 : vector<8x128xf32>
    %cst_25 = arith.constant 9.99999974E-6 : f32
    %56 = vector.broadcast %cst_25 : f32 to vector<8x1xf32>
    %57 = arith.addf %53, %56 : vector<8x1xf32>
    %58 = math.rsqrt %57 : vector<8x1xf32>
    %59 = vector.broadcast %58 : vector<8x1xf32> to vector<8x128xf32>
    %60 = arith.mulf %55, %59 : vector<8x128xf32>
    %c1_26 = arith.constant 1 : index
    %c0_27 = arith.constant 0 : index
    %61 = vector.load %arg5[%c1_26, %c0_27] : memref<3x128xf32, #tpu.memory_space<vmem>>, vector<1x128xf32>
    %62 = vector.broadcast %61 : vector<1x128xf32> to vector<8x128xf32>
    %63 = arith.mulf %60, %62 : vector<8x128xf32>
    %c2_28 = arith.constant 2 : index
    %c0_29 = arith.constant 0 : index
    %64 = vector.load %arg5[%c2_28, %c0_29] : memref<3x128xf32, #tpu.memory_space<vmem>>, vector<1x128xf32>
    %65 = vector.broadcast %64 : vector<1x128xf32> to vector<8x128xf32>
    %66 = arith.addf %63, %65 : vector<8x128xf32>
    %67 = vector.extract_strided_slice %66 {offsets = [0, 0], sizes = [8, 32], strides = [1, 1]} : vector<8x128xf32> to vector<8x32xf32>
    %c0_30 = arith.constant 0 : index
    %c0_31 = arith.constant 0 : index
    %68 = vector.load %arg6[%c0_30, %c0_31] : memref<8x32xf32, #tpu.memory_space<vmem>>, vector<8x32xf32>
    tpu.vector_store %arg6[%c0_30, %c0_31], %67 {strides = array<i32>} : memref<8x32xf32, #tpu.memory_space<vmem>>, vector<8x32xf32>,
    return
  }
  func.func @transform_0(%arg0: i32) -> (i32, i32) {
    %c0_i32 = arith.constant 0 : i32
    %c0_i32_0 = arith.constant 0 : i32
    return %arg0, %c0_i32 : i32, i32
  }
  func.func @transform_1(%arg0: i32) -> (i32, i32) {
    %c0_i32 = arith.constant 0 : i32
    %c0_i32_0 = arith.constant 0 : i32
    %c0_i32_1 = arith.constant 0 : i32
    return %c0_i32, %c0_i32_0 : i32, i32
  }
  func.func @transform_2(%arg0: i32) -> (i32, i32) {
    %c0_i32 = arith.constant 0 : i32
    %c0_i32_0 = arith.constant 0 : i32
    %c0_i32_1 = arith.constant 0 : i32
    return %c0_i32, %c0_i32_0 : i32, i32
  }
  func.func @transform_3(%arg0: i32) -> (i32, i32) {
    %c0_i32 = arith.constant 0 : i32
    %c0_i32_0 = arith.constant 0 : i32
    %c0_i32_1 = arith.constant 0 : i32
    return %c0_i32, %c0_i32_0 : i32, i32
  }
  func.func @transform_4(%arg0: i32) -> (i32, i32) {
    %c0_i32 = arith.constant 0 : i32
    %c0_i32_0 = arith.constant 0 : i32
    %c0_i32_1 = arith.constant 0 : i32
    return %c0_i32, %c0_i32_0 : i32, i32
  }
  func.func @transform_5(%arg0: i32) -> (i32, i32) {
    %c0_i32 = arith.constant 0 : i32
    %c0_i32_0 = arith.constant 0 : i32
    return %arg0, %c0_i32 : i32, i32
  }
}

</mosaic_0001>

<llo_original>
// kernel: tpu_custom_call.1
$region0: #{tpu_custom_call.1}
  #allocation0 [shape = 'u32[]', space=smem, size = 0x4, offset = 0x4, fixed_abs, tag = 'smem constant byte address 0x4 - core index']
  #allocation1 [shape = 'u32[72,128]{1,0:T(1,128)}', space=vmem, size = 0x9000, scoped, tag = 'internal scratch']
  %s0 = inlined_call_operand.hbm [shape: f32[8,16], index: 0, kind: input, shape index: {}]
  %s1 = inlined_call_operand.hbm [shape: f32[16,128], index: 1, kind: input, shape index: {}]
  %s2 = inlined_call_operand.hbm [shape: f32[3,128], index: 2, kind: input, shape index: {}]
  %s3 = inlined_call_operand.hbm [shape: f32[128,128], index: 3, kind: input, shape index: {}]
  %s4 = inlined_call_operand.hbm [shape: f32[3,128], index: 4, kind: input, shape index: {}]
  %s5 = inlined_call_operand.hbm [shape: f32[8,32], index: 5, kind: output, shape index: {}]
  %s6 = sld [smem:[#allocation0]]
  $region50: #{tpu_custom_call.1} parent=0
    _
  %s8 = ssub.s32 1, %s6
  %s9 = scalar_select 0, %s8, %s6
  $region1: #{tpu_custom_call.1} parent=0
    #allocation2 [shape = 'u8[4096]{0}', space=vmem, size = 0x1000, scoped, tag = 'input window, operand 0, single buffered']
    #allocation3 [shape = 's32[1]{0}', space=sflag, size = 0x4, scoped, tag = 'scoped memory for tpu_custom_call.1']
    #allocation4 [shape = 's32[1]{0}', space=sflag, size = 0x4, scoped, tag = 'scoped memory for tpu_custom_call.1']
    #allocation5 [shape = 'u8[8192]{0}', space=vmem, size = 0x2000, scoped, tag = 'input window, operand 1, single buffered']
    #allocation6 [shape = 's32[1]{0}', space=sflag, size = 0x4, scoped, tag = 'scoped memory for tpu_custom_call.1']
    #allocation7 [shape = 'u8[2048]{0}', space=vmem, size = 0x800, scoped, tag = 'input window, operand 2, single buffered']
    #allocation8 [shape = 'u8[65536]{0}', space=vmem, size = 0x10000, scoped, tag = 'input window, operand 3, single buffered']
    #allocation9 [shape = 's32[1]{0}', space=sflag, size = 0x4, scoped, tag = 'scoped memory for tpu_custom_call.1']
    #allocation10 [shape = 'u8[2048]{0}', space=vmem, size = 0x800, scoped, tag = 'input window, operand 4, single buffered']
    #allocation11 [shape = 'u8[4096]{0}', space=vmem, size = 0x1000, scoped, tag = 'output window, operand 0, single buffered']
    %10 = vsyncpa [#allocation3], 0
    %11 = vsyncpa [#allocation6], 0
    %12 = vsyncpa [#allocation9], 0
    %13 = vsyncpa [#allocation4], 0
    // Predicated region
    $region2: #{tpu_custom_call.1} parent=1 // pred_check
      _
    $region3: #{tpu_custom_call.1} parent=1 // pred_check_branch
      %15 = sbr.rel (0) target = $region5
    $region4: #{tpu_custom_call.1} parent=1 // pred_region
      %17 = vsyncadd [#allocation3], 0
      %s19 = sshll.u32 %s0, 4
      %s20 = int_to_ptr.hbm [resolvable:$true] %s19
      %s21 = sshll.u32 [#allocation2], 4
      %s22 = int_to_ptr.vmem [resolvable:$true] %s21
      %24 = dma.hbm_to_vmem [thread:$0]  %s20, 128, %s22, [#allocation3]
    $region5: #{tpu_custom_call.1} parent=1 // pred_fallthru
      _
    // Predicated region
    $region6: #{tpu_custom_call.1} parent=1 // pred_check
      _
    $region7: #{tpu_custom_call.1} parent=1 // pred_check_branch
      %26 = sbr.rel (0) target = $region9
    $region8: #{tpu_custom_call.1} parent=1 // pred_region
      %28 = vsyncadd [#allocation6], 0
      %s29 = sshll.u32 %s1, 4
      %s30 = int_to_ptr.hbm [resolvable:$true] %s29
      %s31 = sshll.u32 [#allocation5], 4
      %s32 = int_to_ptr.vmem [resolvable:$true] %s31
      %37 = dma.hbm_to_vmem [thread:$0]  %s30, 256, %s32, [#allocation6], 128, 128, 8
    $region9: #{tpu_custom_call.1} parent=1 // pred_fallthru
      _
    // Predicated region
    $region10: #{tpu_custom_call.1} parent=1 // pred_check
      _
    $region11: #{tpu_custom_call.1} parent=1 // pred_check_branch
      %39 = sbr.rel (0) target = $region13
    $region12: #{tpu_custom_call.1} parent=1 // pred_region
      %41 = vsyncadd [#allocation6], 0
      %s43 = sshll.u32 %s2, 4
      %s44 = int_to_ptr.hbm [resolvable:$true] %s43
      %s45 = sshll.u32 [#allocation7], 4
      %s46 = int_to_ptr.vmem [resolvable:$true] %s45
      %48 = dma.hbm_to_vmem [thread:$0]  %s44, 64, %s46, [#allocation6]
    $region13: #{tpu_custom_call.1} parent=1 // pred_fallthru
      _
    // Predicated region
    $region14: #{tpu_custom_call.1} parent=1 // pred_check
      _
    $region15: #{tpu_custom_call.1} parent=1 // pred_check_branch
      %50 = sbr.rel (0) target = $region17
    $region16: #{tpu_custom_call.1} parent=1 // pred_region
      %52 = vsyncadd [#allocation9], 0
      %s53 = sshll.u32 %s3, 4
      %s54 = int_to_ptr.hbm [resolvable:$true] %s53
      %s55 = sshll.u32 [#allocation8], 4
      %s56 = int_to_ptr.vmem [resolvable:$true] %s55
      %61 = dma.hbm_to_vmem [thread:$0]  %s54, 2048, %s56, [#allocation9], 128, 128, 8
    $region17: #{tpu_custom_call.1} parent=1 // pred_fallthru
      _
    // Predicated region
    $region18: #{tpu_custom_call.1} parent=1 // pred_check
      _
    $region19: #{tpu_custom_call.1} parent=1 // pred_check_branch
      %63 = sbr.rel (0) target = $region21
    $region20: #{tpu_custom_call.1} parent=1 // pred_region
      %65 = vsyncadd [#allocation9], 0
      %s67 = sshll.u32 %s4, 4
      %s68 = int_to_ptr.hbm [resolvable:$true] %s67
      %s69 = sshll.u32 [#allocation10], 4
      %s70 = int_to_ptr.vmem [resolvable:$true] %s69
      %72 = dma.hbm_to_vmem [thread:$0]  %s68, 64, %s70, [#allocation9]
    $region21: #{tpu_custom_call.1} parent=1 // pred_fallthru
      _
    // Predicated region
    $region22: #{tpu_custom_call.1} parent=1 // pred_check
      _
    $region23: #{tpu_custom_call.1} parent=1 // pred_check_branch
      %74 = sbr.rel (0) target = $region25
    $region24: #{tpu_custom_call.1} parent=1 // pred_region
      %76 = dma.done [#allocation3], 128
    $region25: #{tpu_custom_call.1} parent=1 // pred_fallthru
      _
    // Predicated region
    $region26: #{tpu_custom_call.1} parent=1 // pred_check
      _
    $region27: #{tpu_custom_call.1} parent=1 // pred_check_branch
      %78 = sbr.rel (0) target = $region29
    $region28: #{tpu_custom_call.1} parent=1 // pred_region
      %80 = dma.done [#allocation6], 256
    $region29: #{tpu_custom_call.1} parent=1 // pred_fallthru
      _
    // Predicated region
    $region30: #{tpu_custom_call.1} parent=1 // pred_check
      _
    $region31: #{tpu_custom_call.1} parent=1 // pred_check_branch
      %82 = sbr.rel (0) target = $region33
    $region32: #{tpu_custom_call.1} parent=1 // pred_region
      %84 = dma.done [#allocation6], 64
    $region33: #{tpu_custom_call.1} parent=1 // pred_fallthru
      _
    // Predicated region
    $region34: #{tpu_custom_call.1} parent=1 // pred_check
      _
    $region35: #{tpu_custom_call.1} parent=1 // pred_check_branch
      %86 = sbr.rel (0) target = $region37
    $region36: #{tpu_custom_call.1} parent=1 // pred_region
      %88 = dma.done [#allocation9], 2048
    $region37: #{tpu_custom_call.1} parent=1 // pred_fallthru
      _
    // Predicated region
    $region38: #{tpu_custom_call.1} parent=1 // pred_check
      _
    $region39: #{tpu_custom_call.1} parent=1 // pred_check_branch
      %90 = sbr.rel (0) target = $region41
    $region40: #{tpu_custom_call.1} parent=1 // pred_region
      %92 = dma.done [#allocation9], 64
    $region41: #{tpu_custom_call.1} parent=1 // pred_fallthru
      _
    %v93 = vld [vmem:[#allocation2] sm:$0xff]
    %v94 = vld [vmem:[#allocation5] sm:$0xff]
    %v95 = vld [vmem:[#allocation5 + $0x8] sm:$0xff]
    %v96 = vld [vmem:[#allocation7] sm:$0x1]
    %v97 = vperm.slane %v96, 0
    %vm98 = vcmask 130048
    %v100 = vsel %vm98, %v93, 0
    %102 = vmatpush.msra.mxu0 0.0
    %103 = vmatpush.msra.mxu0 0.0
    %104 = vmatpush.msra.mxu0 0.0
    %105 = vmatpush.msra.mxu0 0.0
    %106 = vmatpush.msra.mxu0 0.0
    %107 = vmatpush.msra.mxu0 0.0
    %108 = vmatpush.msra.mxu0 0.0
    %109 = vmatpush.msra.mxu0 0.0
    %110 = vmatpush.msra.mxu0 0.0
    %111 = vmatpush.msra.mxu0 0.0
    %112 = vmatpush.msra.mxu0 0.0
    %113 = vmatpush.msra.mxu0 0.0
    %114 = vmatpush.msra.mxu0 0.0
    %115 = vmatpush.msra.mxu0 0.0
    %116 = vmatpush.msra.mxu0 %v95
    %117 = vmatpush.msra.mxu0 %v94
    %118 = vmatmul.f32.gmra.mxu0 %v100
    %v119 = vpop.f32.mrf.mxu0
    %v120 = vadd.f32 %v97, %v119
    %121 = vdwg.mxu0
    %v122 = vmax.f32 %v120, 0.0
    %123 = vadd.xlane.f32.xlu0 %v122
    %v124 = vpop.xlane.xlu0 %123
    %v125 = vmul.f32 %v124, 0.03125
    %v126 = vmul.f32 %v122, %v122
    %127 = vadd.xlane.f32.xlu0 %v126
    %v128 = vpop.xlane.xlu0 %127
    %v129 = vmul.f32 %v128, 0.03125
    %v130 = vmul.f32 %v125, %v125
    %v131 = vsub.f32 %v129, %v130
    %v132 = vmax.f32 %v131, 0.0
    %v133 = vsub.f32 %v122, %v125
    %v134 = vadd.f32 %v132, 1e-05
    %v135 = vrsqrt.pop %v134
    %v136 = vmul.f32 %v135, %v134
    %v137 = vmul.f32 %v136, %v135
    %v138 = vmul.f32 0.5, %v137
    %v139 = vsub.f32 1.5, %v138
    %v140 = vmul.f32 %v135, %v139
    %vm141 = vweird.f32 %v134
    %vm142 = vweird.f32 %v135
    %vm143 = vmor %vm141, %vm142
    %v144 = vsel %vm143, %v135, %v140
    %v145 = vmul.f32 %v133, %v144
    %v146 = vld [vmem:[#allocation7 + $0x1] sm:$0x1]
    %v147 = vperm.slane %v146, 0
    %v148 = vmul.f32 %v145, %v147
    %v149 = vld [vmem:[#allocation7 + $0x2] sm:$0x1]
    %v150 = vperm.slane %v149, 0
    %v151 = vadd.f32 %v148, %v150
    %v152 = vld [vmem:[#allocation8] sm:$0xff]
    %v153 = vld [vmem:[#allocation8 + $0x8] sm:$0xff]
    %v154 = vld [vmem:[#allocation8 + $0x10] sm:$0xff]
    %v155 = vld [vmem:[#allocation8 + $0x18] sm:$0xff]
    %v156 = vld [vmem:[#allocation8 + $0x20] sm:$0xff]
    %v157 = vld [vmem:[#allocation8 + $0x28] sm:$0xff]
    %v158 = vld [vmem:[#allocation8 + $0x30] sm:$0xff]
    %v159 = vld [vmem:[#allocation8 + $0x38] sm:$0xff]
    %v160 = vld [vmem:[#allocation8 + $0x40] sm:$0xff]
    %v161 = vld [vmem:[#allocation8 + $0x48] sm:$0xff]
    %v162 = vld [vmem:[#allocation8 + $0x50] sm:$0xff]
    %v163 = vld [vmem:[#allocation8 + $0x58] sm:$0xff]
    %v164 = vld [vmem:[#allocation8 + $0x60] sm:$0xff]
    %v165 = vld [vmem:[#allocation8 + $0x68] sm:$0xff]
    %v166 = vld [vmem:[#allocation8 + $0x70] sm:$0xff]
    %v167 = vld [vmem:[#allocation8 + $0x78] sm:$0xff]
    %v168 = vld [vmem:[#allocation10] sm:$0x1]
    %v169 = vperm.slane %v168, 0
    %170 = vmatpush.msra.mxu0 %v167
    %171 = vmatpush.msra.mxu0 %v166
    %172 = vmatpush.msra.mxu0 %v165
    %173 = vmatpush.msra.mxu0 %v164
    %174 = vmatpush.msra.mxu0 %v163
    %175 = vmatpush.msra.mxu0 %v162
    %176 = vmatpush.msra.mxu0 %v161
    %177 = vmatpush.msra.mxu0 %v160
    %178 = vmatpush.msra.mxu0 %v159
    %179 = vmatpush.msra.mxu0 %v158
    %180 = vmatpush.msra.mxu0 %v157
    %181 = vmatpush.msra.mxu0 %v156
    %182 = vmatpush.msra.mxu0 %v155
    %183 = vmatpush.msra.mxu0 %v154
    %184 = vmatpush.msra.mxu0 %v153
    %185 = vmatpush.msra.mxu0 %v152
    %186 = vmatmul.f32.gmra.mxu0 %v151
    %v187 = vpop.f32.mrf.mxu0
    %v188 = vadd.f32 %v169, %v187
    %189 = vdwg.mxu0
    %v190 = vmax.f32 %v188, 0.0
    %191 = vadd.xlane.f32.xlu0 %v190
    %v192 = vpop.xlane.xlu0 %191
    %v193 = vmul.f32 %v192, 0.03125
    %v194 = vmul.f32 %v190, %v190
    %195 = vadd.xlane.f32.xlu0 %v194
    %v196 = vpop.xlane.xlu0 %195
    %v197 = vmul.f32 %v196, 0.03125
    %v198 = vmul.f32 %v193, %v193
    %v199 = vsub.f32 %v197, %v198
    %v200 = vmax.f32 %v199, 0.0
    %v201 = vsub.f32 %v190, %v193
    %v202 = vadd.f32 %v200, 1e-05
    %v203 = vrsqrt.pop %v202
    %v204 = vmul.f32 %v203, %v202
    %v205 = vmul.f32 %v204, %v203
    %v206 = vmul.f32 0.5, %v205
    %v207 = vsub.f32 1.5, %v206
    %v208 = vmul.f32 %v203, %v207
    %vm209 = vweird.f32 %v202
    %vm210 = vweird.f32 %v203
    %vm211 = vmor %vm209, %vm210
    %v212 = vsel %vm211, %v203, %v208
    %v213 = vmul.f32 %v201, %v212
    %v214 = vld [vmem:[#allocation10 + $0x1] sm:$0x1]
    %v215 = vperm.slane %v214, 0
    %v216 = vmul.f32 %v213, %v215
    %v217 = vld [vmem:[#allocation10 + $0x2] sm:$0x1]
    %v218 = vperm.slane %v217, 0
    %v219 = vadd.f32 %v216, %v218
    %vm220 = vcmask 261120
    %221 = vst.msk [vmem:[#allocation11] sm:$0xff] %vm220, %v219
    // Predicated region
    $region42: #{tpu_custom_call.1} parent=1 // pred_check
      _
    $region43: #{tpu_custom_call.1} parent=1 // pred_check_branch
      %223 = sbr.rel (0) target = $region45
    $region44: #{tpu_custom_call.1} parent=1 // pred_region
      %225 = vsyncadd [#allocation4], 0
      %s227 = sshll.u32 [#allocation11], 4
      %s228 = int_to_ptr.vmem [resolvable:$true] %s227
      %s229 = sshll.u32 %s5, 4
      %s230 = int_to_ptr.hbm [resolvable:$true] %s229
      %232 = dma.vmem_to_hbm [thread:$0]  %s228, 128, %s230, [#allocation4]
    $region45: #{tpu_custom_call.1} parent=1 // pred_fallthru
      _
    // Predicated region
    $region46: #{tpu_custom_call.1} parent=1 // pred_check
      _
    $region47: #{tpu_custom_call.1} parent=1 // pred_check_branch
      %234 = sbr.rel (0) target = $region49
    $region48: #{tpu_custom_call.1} parent=1 // pred_region
      %236 = dma.done [#allocation4], 128
    $region49: #{tpu_custom_call.1} parent=1 // pred_fallthru
      _
    %237 = vsyncpa [#allocation3], 1
    %238 = vsyncpa [#allocation6], 1
    %239 = vsyncpa [#allocation9], 1
    %240 = vsyncpa [#allocation4], 1

</llo_original>
